<compile_context>
chip_gen: v5e
topology: v5e:2x2
jax: 0.10.0
libtpu: 0.0.40
codegen_flags: <defaults>
</compile_context>

<pallas_src>
import jax
import jax.numpy as jnp
from jax.experimental import pallas as pl
from jax.experimental.pallas import tpu as pltpu


def _linear_kernel(x_ref, w_ref, b_ref, o_ref, acc_ref):
    """One (tm, tn) output tile, accumulating over the K grid axis."""
    k = pl.program_id(2)

    # x: (tm, tk) bf16, w: (tk, tn) bf16 -> f32 MXU accumulation.
    prod = jnp.dot(x_ref[...], w_ref[...], preferred_element_type=jnp.float32)

    @pl.when(k == 0)
    def _first():
        # Bias folded into the first K step; no separate zero-init pass.
        acc_ref[...] = prod + b_ref[...]

    @pl.when(k > 0)
    def _rest():
        acc_ref[...] += prod

    @pl.when(k == pl.num_programs(2) - 1)
    def _finalize():
        o_ref[...] = acc_ref[...].astype(o_ref.dtype)


def _round_up(v: int, m: int) -> int:
    return ((v + m - 1) // m) * m


def _pick_tile(dim: int, target: int, granule: int) -> int:
    """Largest granule-multiple <= target that exactly divides `dim`.

    `dim` is already a multiple of `granule`, so `granule` is a valid fallback.
    """
    target = max(target, granule)
    if dim <= target:
        return dim
    t = (target // granule) * granule
    while dim % t:
        t -= granule
    return t


def multi_label_regression(x, weight, bias, *, tm=512, tn=512, tk=1024,
                           compute_dtype=jnp.bfloat16):
    """y = x @ weight.T + bias, tiled over an (M, N, K) grid."""
    B, in_size = x.shape
    out_size, in_size_w = weight.shape
    assert in_size == in_size_w, "weight must be (output_size, input_size)"
    assert bias.shape == (out_size,)

    # Hardware-granule padding only (8 sublane / 128 lane).
    Mp = _round_up(B, 8)
    Kp = _round_up(in_size, 128)
    Np = _round_up(out_size, 128)

    # Tiles that exactly divide the granule-padded dims (no tile-level padding).
    tm = _pick_tile(Mp, tm, 8)
    tk = _pick_tile(Kp, tk, 128)
    tn = _pick_tile(Np, tn, 128)

    # v7x megacore: keep at least one parallel grid axis with >= 2 steps when
    # the problem is big enough (no effect on v5e/v6e or small shapes).
    if Mp // tm == 1 and Np // tn == 1 and tn >= 512:
        tn //= 2

    # bf16 operands (cast + weight transpose fuse into one pass; constant-folds
    # under jit for static params). Bias stays f32 for the accumulator.
    x_c = x.astype(compute_dtype)
    w_t = weight.T.astype(compute_dtype)           # (In, Out)
    b_f = bias.astype(jnp.float32)

    x_p = x_c if (Mp == B and Kp == in_size) else jnp.pad(
        x_c, ((0, Mp - B), (0, Kp - in_size)))
    w_p = w_t if (Kp == in_size and Np == out_size) else jnp.pad(
        w_t, ((0, Kp - in_size), (0, Np - out_size)))
    b_p = (b_f if Np == out_size else jnp.pad(b_f, (0, Np - out_size))
           ).reshape(1, Np)

    grid = (Mp // tm, Np // tn, Kp // tk)

    flops = 2 * Mp * Np * Kp
    bytes_accessed = (x_p.size * x_p.dtype.itemsize
                      + w_p.size * w_p.dtype.itemsize
                      + b_p.size * b_p.dtype.itemsize
                      + Mp * Np * x.dtype.itemsize)

    out_p = pl.pallas_call(
        _linear_kernel,
        out_shape=jax.ShapeDtypeStruct((Mp, Np), x.dtype),
        grid_spec=pltpu.PrefetchScalarGridSpec(
            num_scalar_prefetch=0,
            grid=grid,
            in_specs=[
                pl.BlockSpec((tm, tk), lambda i, j, k: (i, k)),   # x  (M, K)
                pl.BlockSpec((tk, tn), lambda i, j, k: (k, j)),   # w.T (K, N)
                pl.BlockSpec((1, tn), lambda i, j, k: (0, j)),    # bias
            ],
            out_specs=pl.BlockSpec((tm, tn), lambda i, j, k: (i, j)),
            scratch_shapes=[pltpu.VMEM((tm, tn), jnp.float32)],
        ),
        compiler_params=pltpu.CompilerParams(
            dimension_semantics=("parallel", "parallel", "arbitrary"),
        ),
        cost_estimate=pl.CostEstimate(
            flops=flops, bytes_accessed=bytes_accessed, transcendentals=0),
    )(x_p, w_p, b_p)

    if Mp != B or Np != out_size:
        out_p = out_p[:B, :out_size]
    return out_p


def _reference(x, weight, bias, compute_dtype=jnp.float32):
    """Reference with the same operand rounding as the kernel (f32 accumulate)."""
    xc = x.astype(compute_dtype).astype(jnp.float32)
    wc = weight.astype(compute_dtype).astype(jnp.float32)
    return jnp.dot(xc, wc.T, precision=jax.lax.Precision.HIGHEST) + bias


if __name__ == "__main__":
    key = jax.random.PRNGKey(0)

    # --- Test 1: tiny demo shapes matching the module's forward -------------
    batch, input_size, output_size = 8, 32, 16
    k1, k2, k3, key = jax.random.split(key, 4)
    x = jax.random.normal(k1, (batch, input_size), dtype=jnp.float32)
    bound = 1.0 / jnp.sqrt(jnp.float32(input_size))
    weight = jax.random.uniform(k2, (output_size, input_size),
                                minval=-bound, maxval=bound, dtype=jnp.float32)
    bias = jax.random.uniform(k3, (output_size,),
                              minval=-bound, maxval=bound, dtype=jnp.float32)

    # bf16-operand (default) path.
    out = jax.block_until_ready(multi_label_regression(x, weight, bias))
    ref = _reference(x, weight, bias, compute_dtype=jnp.bfloat16)
    assert out.shape == (batch, output_size)
    assert jnp.allclose(out, ref, atol=1e-3, rtol=1e-3)

    # f32-operand path for exact-ish validation.
    out_f32 = jax.block_until_ready(
        multi_label_regression(x, weight, bias, compute_dtype=jnp.float32))
    ref_f32 = _reference(x, weight, bias)
    assert jnp.allclose(out_f32, ref_f32, atol=1e-4, rtol=1e-4)

    # --- Test 2: multi-tile / granule-padding case (304 x 256 x 640) --------
    batch2, input2, output2 = 300, 640, 200
    k1, k2, k3, key = jax.random.split(key, 4)
    x2 = jax.random.normal(k1, (batch2, input2), dtype=jnp.float32)
    bound2 = 1.0 / jnp.sqrt(jnp.float32(input2))
    w2 = jax.random.uniform(k2, (output2, input2),
                            minval=-bound2, maxval=bound2, dtype=jnp.float32)
    b2 = jax.random.uniform(k3, (output2,),
                            minval=-bound2, maxval=bound2, dtype=jnp.float32)

    out2 = jax.block_until_ready(multi_label_regression(x2, w2, b2))
    ref2 = _reference(x2, w2, b2, compute_dtype=jnp.bfloat16)
    assert out2.shape == (batch2, output2)
    assert jnp.allclose(out2, ref2, atol=2e-3, rtol=2e-3)

    print("KERNEL_OK")
</pallas_src>

<mosaic_0001>
module attributes {stable_mosaic.version = 11 : i64} {
  func.func @_linear_kernel(%arg0: i32, %arg1: i32, %arg2: i32, %arg3: memref<8x128xbf16, #tpu.memory_space<vmem>>, %arg4: memref<128x128xbf16, #tpu.memory_space<vmem>>, %arg5: memref<1x128xf32, #tpu.memory_space<vmem>>, %arg6: memref<8x128xf32, #tpu.memory_space<vmem>>, %arg7: memref<8x128xf32, #tpu.memory_space<vmem>>) attributes {dimension_semantics = [#tpu.dimension_semantics<parallel>, #tpu.dimension_semantics<parallel>, #tpu.dimension_semantics<arbitrary>], iteration_bounds = array<i64: 1, 1, 1>, scalar_prefetch = 0 : i64, scratch_operands = 1 : i64, tpu.core_type = #tpu.core_type<tc>, window_params = [{transform_indices = @transform_0, window_bounds = array<i64: 8, 128>}, {transform_indices = @transform_1, window_bounds = array<i64: 128, 128>}, {transform_indices = @transform_2, window_bounds = array<i64: 1, 128>}, {transform_indices = @transform_3, window_bounds = array<i64: 8, 128>}]} {
    %c0 = arith.constant 0 : index
    %c0_0 = arith.constant 0 : index
    %0 = vector.load %arg3[%c0, %c0_0] : memref<8x128xbf16, #tpu.memory_space<vmem>>, vector<8x128xbf16>
    %c0_1 = arith.constant 0 : index
    %c0_2 = arith.constant 0 : index
    %1 = vector.load %arg4[%c0_1, %c0_2] : memref<128x128xbf16, #tpu.memory_space<vmem>>, vector<128x128xbf16>
    %cst = arith.constant dense<0.000000e+00> : vector<8x128xf32>
    %2 = tpu.matmul %0, %1, %cst {dimension_numbers = #tpu.dot_dimension_numbers<[1], [0], [0], [1], [0, 0, 1, 1], [], []>} : vector<8x128xbf16>, vector<128x128xbf16>, vector<8x128xf32> -> vector<8x128xf32>
    %c0_i32 = arith.constant 0 : i32
    %3 = arith.cmpi eq, %arg2, %c0_i32 : i32
    %4 = arith.extui %3 : i1 to i32
    %c0_i32_3 = arith.constant 0 : i32
    %5 = arith.cmpi ne, %4, %c0_i32_3 : i32
    scf.if %5 {
      %c0_8 = arith.constant 0 : index
      %c0_9 = arith.constant 0 : index
      %12 = vector.load %arg5[%c0_8, %c0_9] : memref<1x128xf32, #tpu.memory_space<vmem>>, vector<1x128xf32>
      %13 = vector.broadcast %12 : vector<1x128xf32> to vector<8x128xf32>
      %14 = arith.addf %2, %13 : vector<8x128xf32>
      %c0_10 = arith.constant 0 : index
      %c0_11 = arith.constant 0 : index
      %15 = vector.load %arg7[%c0_10, %c0_11] : memref<8x128xf32, #tpu.memory_space<vmem>>, vector<8x128xf32>
      tpu.vector_store %arg7[%c0_10, %c0_11], %14 {strides = array<i32>} : memref<8x128xf32, #tpu.memory_space<vmem>>, vector<8x128xf32>,
    } else {
    }
    %c0_i32_4 = arith.constant 0 : i32
    %6 = arith.cmpi sgt, %arg2, %c0_i32_4 : i32
    %7 = arith.extui %6 : i1 to i32
    %c0_i32_5 = arith.constant 0 : i32
    %8 = arith.cmpi ne, %7, %c0_i32_5 : i32
    scf.if %8 {
      %c0_8 = arith.constant 0 : index
      %c0_9 = arith.constant 0 : index
      %12 = vector.load %arg7[%c0_8, %c0_9] : memref<8x128xf32, #tpu.memory_space<vmem>>, vector<8x128xf32>
      %13 = arith.addf %12, %2 : vector<8x128xf32>
      %c0_10 = arith.constant 0 : index
      %c0_11 = arith.constant 0 : index
      %14 = vector.load %arg7[%c0_10, %c0_11] : memref<8x128xf32, #tpu.memory_space<vmem>>, vector<8x128xf32>
      tpu.vector_store %arg7[%c0_10, %c0_11], %13 {strides = array<i32>} : memref<8x128xf32, #tpu.memory_space<vmem>>, vector<8x128xf32>,
    } else {
    }
    %c0_i32_6 = arith.constant 0 : i32
    %9 = arith.cmpi eq, %arg2, %c0_i32_6 : i32
    %10 = arith.extui %9 : i1 to i32
    %c0_i32_7 = arith.constant 0 : i32
    %11 = arith.cmpi ne, %10, %c0_i32_7 : i32
    scf.if %11 {
      %c0_8 = arith.constant 0 : index
      %c0_9 = arith.constant 0 : index
      %12 = vector.load %arg7[%c0_8, %c0_9] : memref<8x128xf32, #tpu.memory_space<vmem>>, vector<8x128xf32>
      %c0_10 = arith.constant 0 : index
      %c0_11 = arith.constant 0 : index
      %13 = vector.load %arg6[%c0_10, %c0_11] : memref<8x128xf32, #tpu.memory_space<vmem>>, vector<8x128xf32>
      tpu.vector_store %arg6[%c0_10, %c0_11], %12 {strides = array<i32>} : memref<8x128xf32, #tpu.memory_space<vmem>>, vector<8x128xf32>,
    } else {
    }
    return
  }
  func.func @transform_0(%arg0: i32, %arg1: i32, %arg2: i32) -> (i32, i32) {
    %c0_i32 = arith.constant 0 : i32
    return %arg0, %arg2 : i32, i32
  }
  func.func @transform_1(%arg0: i32, %arg1: i32, %arg2: i32) -> (i32, i32) {
    %c0_i32 = arith.constant 0 : i32
    return %arg2, %arg1 : i32, i32
  }
  func.func @transform_2(%arg0: i32, %arg1: i32, %arg2: i32) -> (i32, i32) {
    %c0_i32 = arith.constant 0 : i32
    %c0_i32_0 = arith.constant 0 : i32
    return %c0_i32, %arg1 : i32, i32
  }
  func.func @transform_3(%arg0: i32, %arg1: i32, %arg2: i32) -> (i32, i32) {
    %c0_i32 = arith.constant 0 : i32
    return %arg0, %arg1 : i32, i32
  }
}

</mosaic_0001>

<llo_original>
// kernel: tpu_custom_call.1
$region0: #{tpu_custom_call.1}
  #allocation0 [shape = 'u32[]', space=smem, size = 0x4, offset = 0x4, fixed_abs, tag = 'smem constant byte address 0x4 - core index']
  #allocation1 [shape = 'u32[72,128]{1,0:T(1,128)}', space=vmem, size = 0x9000, scoped, tag = 'internal scratch']
  #allocation2 [shape = 'f32[8,128]{1,0:T(8,128)}', space=vmem, size = 0x1000, scoped, tag = 'scratch operand']
  %s0 = inlined_call_operand.hbm [shape: bf16[8,128], index: 0, kind: input, shape index: {}]
  %s1 = inlined_call_operand.hbm [shape: bf16[128,128], index: 1, kind: input, shape index: {}]
  %s2 = inlined_call_operand.vmem [shape: f32[1,128], index: 2, kind: input, shape index: {}]
  %s3 = inlined_call_operand.hbm [shape: f32[8,128], index: 3, kind: output, shape index: {}]
  %s4 = sld [smem:[#allocation0]]
  $region42: #{tpu_custom_call.1} parent=0
    _
  %s6 = ssub.s32 1, %s4
  %s7 = scalar_select 0, %s6, %s4
  $region1: #{tpu_custom_call.1} parent=0
    #allocation3 [shape = 'u8[2048]{0}', space=vmem, size = 0x800, scoped, tag = 'input window, operand 0, single buffered']
    #allocation4 [shape = 's32[1]{0}', space=sflag, size = 0x4, scoped, tag = 'scoped memory for tpu_custom_call.1']
    #allocation5 [shape = 's32[1]{0}', space=sflag, size = 0x4, scoped, tag = 'scoped memory for tpu_custom_call.1']
    #allocation6 [shape = 'u8[32768]{0}', space=vmem, size = 0x8000, scoped, tag = 'input window, operand 1, single buffered']
    #allocation7 [shape = 's32[1]{0}', space=sflag, size = 0x4, scoped, tag = 'scoped memory for tpu_custom_call.1']
    #allocation8 [shape = 'u8[4096]{0}', space=vmem, size = 0x1000, scoped, tag = 'output window, operand 0, single buffered']
    %8 = vsyncpa [#allocation4], 0
    %9 = vsyncpa [#allocation7], 0
    %10 = vsyncpa [#allocation5], 0
    // Predicated region
    $region2: #{tpu_custom_call.1} parent=1 // pred_check
      _
    $region3: #{tpu_custom_call.1} parent=1 // pred_check_branch
      %12 = sbr.rel (0) target = $region5
    $region4: #{tpu_custom_call.1} parent=1 // pred_region
      %14 = vsyncadd [#allocation4], 0
      %s16 = sshll.u32 %s0, 4
      %s17 = int_to_ptr.hbm [resolvable:$true] %s16
      %s18 = sshll.u32 [#allocation3], 4
      %s19 = int_to_ptr.vmem [resolvable:$true] %s18
      %21 = dma.hbm_to_vmem [thread:$0]  %s17, 64, %s19, [#allocation4]
    $region5: #{tpu_custom_call.1} parent=1 // pred_fallthru
      _
    // Predicated region
    $region6: #{tpu_custom_call.1} parent=1 // pred_check
      _
    $region7: #{tpu_custom_call.1} parent=1 // pred_check_branch
      %23 = sbr.rel (0) target = $region9
    $region8: #{tpu_custom_call.1} parent=1 // pred_region
      %25 = vsyncadd [#allocation7], 0
      %s26 = sshll.u32 %s1, 4
      %s27 = int_to_ptr.hbm [resolvable:$true] %s26
      %s28 = sshll.u32 [#allocation6], 4
      %s29 = int_to_ptr.vmem [resolvable:$true] %s28
      %34 = dma.hbm_to_vmem [thread:$0]  %s27, 1024, %s29, [#allocation7], 64, 64, 4
    $region9: #{tpu_custom_call.1} parent=1 // pred_fallthru
      _
    // Predicated region
    $region10: #{tpu_custom_call.1} parent=1 // pred_check
      _
    $region11: #{tpu_custom_call.1} parent=1 // pred_check_branch
      %36 = sbr.rel (0) target = $region13
    $region12: #{tpu_custom_call.1} parent=1 // pred_region
      _
    $region13: #{tpu_custom_call.1} parent=1 // pred_fallthru
      _
    // Predicated region
    $region14: #{tpu_custom_call.1} parent=1 // pred_check
      _
    $region15: #{tpu_custom_call.1} parent=1 // pred_check_branch
      %38 = sbr.rel (0) target = $region17
    $region16: #{tpu_custom_call.1} parent=1 // pred_region
      %40 = dma.done [#allocation4], 64
    $region17: #{tpu_custom_call.1} parent=1 // pred_fallthru
      _
    // Predicated region
    $region18: #{tpu_custom_call.1} parent=1 // pred_check
      _
    $region19: #{tpu_custom_call.1} parent=1 // pred_check_branch
      %42 = sbr.rel (0) target = $region21
    $region20: #{tpu_custom_call.1} parent=1 // pred_region
      %44 = dma.done [#allocation7], 1024
    $region21: #{tpu_custom_call.1} parent=1 // pred_fallthru
      _
    %v45 = vld [vmem:[#allocation3] sm:$0xf]
    %v46 = vld [vmem:[#allocation6] sm:$0xf]
    %v47 = vld [vmem:[#allocation6 + $0x4] sm:$0xf]
    %v48 = vld [vmem:[#allocation6 + $0x8] sm:$0xf]
    %v49 = vld [vmem:[#allocation6 + $0xc] sm:$0xf]
    %v50 = vld [vmem:[#allocation6 + $0x10] sm:$0xf]
    %v51 = vld [vmem:[#allocation6 + $0x14] sm:$0xf]
    %v52 = vld [vmem:[#allocation6 + $0x18] sm:$0xf]
    %v53 = vld [vmem:[#allocation6 + $0x1c] sm:$0xf]
    %v54 = vld [vmem:[#allocation6 + $0x20] sm:$0xf]
    %v55 = vld [vmem:[#allocation6 + $0x24] sm:$0xf]
    %v56 = vld [vmem:[#allocation6 + $0x28] sm:$0xf]
    %v57 = vld [vmem:[#allocation6 + $0x2c] sm:$0xf]
    %v58 = vld [vmem:[#allocation6 + $0x30] sm:$0xf]
    %v59 = vld [vmem:[#allocation6 + $0x34] sm:$0xf]
    %v60 = vld [vmem:[#allocation6 + $0x38] sm:$0xf]
    %v61 = vld [vmem:[#allocation6 + $0x3c] sm:$0xf]
    %v78 = vunpack.c.l.b16 %v46
    %v79 = vunpack.c.l.b16 %v47
    %v80 = vunpack.c.l.b16 %v48
    %v81 = vunpack.c.l.b16 %v49
    %v82 = vunpack.c.l.b16 %v50
    %v83 = vunpack.c.l.b16 %v51
    %v84 = vunpack.c.l.b16 %v52
    %v85 = vunpack.c.l.b16 %v53
    %v86 = vunpack.c.l.b16 %v54
    %v87 = vunpack.c.l.b16 %v55
    %v88 = vunpack.c.l.b16 %v56
    %v89 = vunpack.c.l.b16 %v57
    %v90 = vunpack.c.l.b16 %v58
    %v91 = vunpack.c.l.b16 %v59
    %v92 = vunpack.c.l.b16 %v60
    %v93 = vunpack.c.l.b16 %v61
    %v94 = vpack.c.b16 %v79, %v78
    %v95 = vpack.c.b16 %v81, %v80
    %v96 = vpack.c.b16 %v83, %v82
    %v97 = vpack.c.b16 %v85, %v84
    %v98 = vpack.c.b16 %v87, %v86
    %v99 = vpack.c.b16 %v89, %v88
    %v100 = vpack.c.b16 %v91, %v90
    %v101 = vpack.c.b16 %v93, %v92
    %110 = vmatpush.bf16.msra.mxu0 %v101
    %111 = vmatpush.bf16.msra.mxu0 %v100
    %112 = vmatpush.bf16.msra.mxu0 %v99
    %113 = vmatpush.bf16.msra.mxu0 %v98
    %114 = vmatpush.bf16.msra.mxu0 %v97
    %115 = vmatpush.bf16.msra.mxu0 %v96
    %116 = vmatpush.bf16.msra.mxu0 %v95
    %117 = vmatpush.bf16.msra.mxu0 %v94
    %118 = vmatmul.bf16.gmra.mxu0 %v45
    %v119 = vpop.f32.mrf.mxu0
    %v120 = vadd.f32 0.0, %v119
    %v121 = vpop.f32.mrf.mxu0
    %122 = vdwg.mxu0
    %p123 = scmp.eq.s32.totalorder 0, 0
    // Predicated region
    $region22: #{tpu_custom_call.1} parent=1 // pred_check
      %p124 = pneg %p123
    $region23: #{tpu_custom_call.1} parent=1 // pred_check_branch
      %126 = sbr.rel (%p124) target = $region25
    $region24: #{tpu_custom_call.1} parent=1 // pred_region
      %v127 = vld [vmem:[%s2] sm:$0x1]
      %v129 = vperm.slane %v127, 0
      %v131 = vadd.f32 %v120, %v129
      %132 = vst [vmem:[#allocation2] sm:$0xff] %v131
    $region25: #{tpu_custom_call.1} parent=1 // pred_fallthru
      _
    %p133 = scmp.gt.s32.totalorder 0, 0
    // Predicated region
    $region26: #{tpu_custom_call.1} parent=1 // pred_check
      %p134 = pneg %p133
    $region27: #{tpu_custom_call.1} parent=1 // pred_check_branch
      %136 = sbr.rel (%p134) target = $region29
    $region28: #{tpu_custom_call.1} parent=1 // pred_region
      %v137 = vld [vmem:[#allocation2] sm:$0xff]
      %v138 = vadd.f32 %v137, %v120
      %139 = vst [vmem:[#allocation2] sm:$0xff] %v138
    $region29: #{tpu_custom_call.1} parent=1 // pred_fallthru
      _
    // Predicated region
    $region30: #{tpu_custom_call.1} parent=1 // pred_check
      %p140 = pneg %p123
    $region31: #{tpu_custom_call.1} parent=1 // pred_check_branch
      %142 = sbr.rel (%p140) target = $region33
    $region32: #{tpu_custom_call.1} parent=1 // pred_region
      %v143 = vld [vmem:[#allocation2] sm:$0xff]
      %144 = vst [vmem:[#allocation8] sm:$0xff] %v143
    $region33: #{tpu_custom_call.1} parent=1 // pred_fallthru
      _
    // Predicated region
    $region34: #{tpu_custom_call.1} parent=1 // pred_check
      _
    $region35: #{tpu_custom_call.1} parent=1 // pred_check_branch
      %146 = sbr.rel (0) target = $region37
    $region36: #{tpu_custom_call.1} parent=1 // pred_region
      %148 = vsyncadd [#allocation5], 0
      %s150 = sshll.u32 [#allocation8], 4
      %s151 = int_to_ptr.vmem [resolvable:$true] %s150
      %s152 = sshll.u32 %s3, 4
      %s153 = int_to_ptr.hbm [resolvable:$true] %s152
      %155 = dma.vmem_to_hbm [thread:$0]  %s151, 128, %s153, [#allocation5]
    $region37: #{tpu_custom_call.1} parent=1 // pred_fallthru
      _
    // Predicated region
    $region38: #{tpu_custom_call.1} parent=1 // pred_check
      _
    $region39: #{tpu_custom_call.1} parent=1 // pred_check_branch
      %157 = sbr.rel (0) target = $region41
    $region40: #{tpu_custom_call.1} parent=1 // pred_region
      %159 = dma.done [#allocation5], 128
    $region41: #{tpu_custom_call.1} parent=1 // pred_fallthru
      _
    %160 = vsyncpa [#allocation4], 1
    %161 = vsyncpa [#allocation7], 1
    %162 = vsyncpa [#allocation5], 1

</llo_original>
